<compile_context>
chip_gen: v7x
topology: tpu7x:2x2x1
jax: 0.10.0
libtpu: 0.0.40
codegen_flags: <defaults>
</compile_context>

<pallas_src>
import math
import functools

import jax
import jax.numpy as jnp
from jax.experimental import pallas as pl
from jax.experimental.pallas import tpu as pltpu


# ----------------------------------------------------------------------------- taps / reference
def gaussian_taps_1d(kernel_size: int, sigma: float) -> jnp.ndarray:
    """Normalized 1D Gaussian taps. outer(taps, taps) == the module's 2D kernel."""
    mean = (kernel_size - 1) / 2.0
    xs = jnp.arange(kernel_size, dtype=jnp.float32)
    g = (1.0 / (sigma * math.sqrt(2.0 * math.pi))
         * jnp.exp(-((xs - mean) / sigma) ** 2 / 2.0))
    return g / jnp.sum(g)


def make_gaussian_weight(channels: int, kernel_size: int, sigma: float, dim: int = 2):
    """Reproduce GaussianSmoothing.__init__ weight buffer: shape (C, 1, K, K). (reference)"""
    ks = [kernel_size] * dim
    sg = [float(sigma)] * dim
    grids = jnp.meshgrid(*[jnp.arange(s, dtype=jnp.float32) for s in ks], indexing="ij")
    kernel = jnp.ones((), dtype=jnp.float32)
    for size, std, mgrid in zip(ks, sg, grids):
        mean = (size - 1) / 2.0
        kernel = kernel * (1.0 / (std * math.sqrt(2.0 * math.pi))
                           * jnp.exp(-((mgrid - mean) / std) ** 2 / 2.0))
    kernel = kernel / jnp.sum(kernel)
    kernel = kernel.reshape((1, 1) + kernel.shape)
    kernel = jnp.tile(kernel, (channels,) + (1,) * (kernel.ndim - 1))
    return kernel


# ----------------------------------------------------------------------------- blur matrices
def _blur_matrix(n: int, taps: jnp.ndarray, pad: int) -> jnp.ndarray:
    """Banded (n, n) matrix A with reflect padding folded in:
       (A @ v)[i] == sum_k taps[k] * v[reflect(i - pad + k)]   (PyTorch 'reflect', no edge repeat)."""
    K = taps.shape[0]
    src = jnp.arange(n)[:, None] - pad + jnp.arange(K)[None, :]        # (n, K) source indices
    src = jnp.abs(src)                                                  # reflect at 0
    src = jnp.where(src >= n, 2 * (n - 1) - src, src)                   # reflect at n-1 (pad <= n-1)
    onehot = (src[:, :, None] == jnp.arange(n)[None, None, :]).astype(jnp.float32)   # (n, K, n)
    return jnp.sum(taps[None, :, None] * onehot, axis=1)                # (n, n)


# ----------------------------------------------------------------------------- kernel
def _gauss_blur_mxu_kernel(ah_ref, awl_ref, x_ref, o_ref, *, nblk: int):
    # ah_ref : VMEM (H, H) f32 -- vertical blur (left-multiply), reflect padding folded in
    # awl_ref: VMEM (L, L) f32 -- horizontal blur (right-multiply), block-diagonal over the
    #                             F images folded into the lane axis
    # x_ref  : VMEM (nblk, H, L) input block (nblk folded images)
    # o_ref  : VMEM (nblk, H, L) output block
    ah = ah_ref[...]
    awl = awl_ref[...]
    for n in range(nblk):                                   # nblk small & static -> cheap unroll
        xi = x_ref[n].astype(jnp.float32)                                      # (H, L)
        t = jnp.dot(ah, xi, preferred_element_type=jnp.float32)                # vertical pass (MXU)
        o_ref[n] = jnp.dot(t, awl, preferred_element_type=jnp.float32).astype(o_ref.dtype)


# ----------------------------------------------------------------------------- block picker
def _pick_block(n_groups: int, H: int, L: int, itemsize: int, *,
                budget_bytes: int = 12 << 20, max_nblk: int = 8, min_steps: int = 8) -> int:
    """Folded images per grid step.

    Sized from the real dtype itemsize (in/out double buffers + f32 temporaries); keeps
    >= min_steps grid steps when possible so the 'parallel' axis load-balances across
    TensorCores (v7x has 2) and pipeline prefetch stays overlapped; the 12 MiB budget
    keeps the footprint comfortably inside even v7x's 64 MiB VMEM (v5e/v6e could go
    larger, but these blocks already amortize the ~0.35 us/step overhead)."""
    per_img = H * L * (2 * 2 * itemsize + 2 * 4)   # in+out double-buffered + two f32 temps
    cap = max(1, budget_bytes // per_img)
    cap = min(cap, max_nblk)
    if n_groups > min_steps:
        cap = min(cap, max(1, n_groups // min_steps))
    return int(max(1, min(cap, n_groups)))


# ----------------------------------------------------------------------------- wrapper
def gaussian_smoothing(x, taps_1d, kernel_size: int):
    """Depthwise 2D Gaussian blur with reflect padding. x: (B, C, H, W) -> (B, C, H, W)."""
    B, C, H, W = x.shape
    K = int(kernel_size)
    assert K % 2 == 1, "same-size output assumes odd kernel_size (as the PyTorch module)"
    pad = K // 2
    assert pad <= H - 1 and pad <= W - 1, "reflect padding requires pad <= dim - 1"

    N = B * C                                # all channels share the taps -> collapse B*C
    taps = taps_1d.astype(jnp.float32)
    A_h = _blur_matrix(H, taps, pad)         # (H, H) left-multiply (vertical)
    A_w = _blur_matrix(W, taps, pad)         # (W, W) horizontal

    # Lane-dense repack: fold F images into lanes when W < 128.
    F = (128 + W - 1) // W if W < 128 else 1
    L = F * W
    A_wL = jnp.kron(jnp.eye(F, dtype=jnp.float32), A_w.T)   # (L, L) block-diagonal right-multiply

    n_groups = (N + F - 1) // F
    nblk = _pick_block(n_groups, H, L, x.dtype.itemsize)
    n_groups_p = ((n_groups + nblk - 1) // nblk) * nblk      # pad to a block multiple (no divisor req.)
    n_pad = n_groups_p * F - N

    xn = x.reshape(N, H, W)
    if n_pad:
        xn = jnp.concatenate([xn, jnp.zeros((n_pad, H, W), x.dtype)], axis=0)
    if F > 1:
        xf = xn.reshape(n_groups_p, F, H, W).transpose(0, 2, 1, 3).reshape(n_groups_p, H, L)
    else:
        xf = xn.reshape(n_groups_p, H, L)

    grid = (n_groups_p // nblk,)

    blk_elems = nblk * H * L
    footprint = (2 * 2 * blk_elems * x.dtype.itemsize        # in + out, double-buffered
                 + 2 * blk_elems * 4                          # f32 temporaries
                 + 2 * (H * H + L * L) * 4)                   # resident blur matrices
    vmem_limit = int(min(max(2 * footprint + (8 << 20), 32 << 20), 56 << 20))

    kern = functools.partial(_gauss_blur_mxu_kernel, nblk=nblk)
    out = pl.pallas_call(
        kern,
        out_shape=jax.ShapeDtypeStruct((n_groups_p, H, L), x.dtype),
        grid_spec=pltpu.PrefetchScalarGridSpec(
            num_scalar_prefetch=0,
            grid=grid,
            in_specs=[
                pl.BlockSpec((H, H), lambda n: (0, 0)),            # A_h  (resident, fetched once)
                pl.BlockSpec((L, L), lambda n: (0, 0)),            # A_wL (resident, fetched once)
                pl.BlockSpec((nblk, H, L), lambda n: (n, 0, 0)),   # input block
            ],
            out_specs=pl.BlockSpec((nblk, H, L), lambda n: (n, 0, 0)),
        ),
        compiler_params=pltpu.CompilerParams(
            dimension_semantics=("parallel",),
            vmem_limit_bytes=vmem_limit,
        ),
    )(A_h, A_wL, xf)

    if F > 1:
        out = out.reshape(n_groups_p, H, F, W).transpose(0, 2, 1, 3).reshape(n_groups_p * F, H, W)
    else:
        out = out.reshape(n_groups_p * F, H, W)
    return out[:N].reshape(B, C, H, W)


# ----------------------------------------------------------------------------- demo / check
if __name__ == "__main__":
    B, C, H, W = 2, 4, 16, 16
    kernel_size = 5
    sigma = 1.0

    key = jax.random.PRNGKey(0)
    x = jax.random.normal(key, (B, C, H, W), dtype=jnp.float32)

    taps = gaussian_taps_1d(kernel_size, sigma)
    out = gaussian_smoothing(x, taps, kernel_size)
    out = jax.block_until_ready(out)

    # Reference: exact module math — reflect pad + depthwise 2D conv with the (C,1,K,K) buffer.
    weight2d = make_gaussian_weight(C, kernel_size, sigma, dim=2)
    pad = kernel_size // 2
    x_pad = jnp.pad(x, ((0, 0), (0, 0), (pad, pad), (pad, pad)), mode="reflect")
    ref = jax.lax.conv_general_dilated(
        x_pad, weight2d, window_strides=(1, 1), padding="VALID",
        dimension_numbers=("NCHW", "OIHW", "NCHW"), feature_group_count=C,
        precision=jax.lax.Precision.HIGHEST)

    assert out.shape == (B, C, H, W)
    # Tolerance leaves headroom for the MXU's multi-pass f32 matmul rounding.
    assert jnp.max(jnp.abs(out - ref)) < 1e-4

    print("KERNEL_OK")
</pallas_src>

<mosaic_0001>
module attributes {stable_mosaic.version = 11 : i64} {
  func.func @_gauss_blur_mxu_kernel(%arg0: i32, %arg1: memref<16x16xf32, #tpu.memory_space<vmem>>, %arg2: memref<128x128xf32, #tpu.memory_space<vmem>>, %arg3: memref<1x16x128xf32, #tpu.memory_space<vmem>>, %arg4: memref<1x16x128xf32, #tpu.memory_space<vmem>>) attributes {dimension_semantics = [#tpu.dimension_semantics<parallel>], iteration_bounds = array<i64: 1>, scalar_prefetch = 0 : i64, scratch_operands = 0 : i64, tpu.core_type = #tpu.core_type<tc>, window_params = [{pipeline_mode = #tpu.pipeline_mode<synchronous>, transform_indices = @transform_0, window_bounds = array<i64: 16, 16>}, {pipeline_mode = #tpu.pipeline_mode<synchronous>, transform_indices = @transform_1, window_bounds = array<i64: 128, 128>}, {transform_indices = @transform_2, window_bounds = array<i64: 1, 16, 128>}, {transform_indices = @transform_3, window_bounds = array<i64: 1, 16, 128>}]} {
    %c0 = arith.constant 0 : index
    %c0_0 = arith.constant 0 : index
    %0 = vector.load %arg1[%c0, %c0_0] : memref<16x16xf32, #tpu.memory_space<vmem>>, vector<16x16xf32>
    %c0_1 = arith.constant 0 : index
    %c0_2 = arith.constant 0 : index
    %1 = vector.load %arg2[%c0_1, %c0_2] : memref<128x128xf32, #tpu.memory_space<vmem>>, vector<128x128xf32>
    %c0_3 = arith.constant 0 : index
    %c0_4 = arith.constant 0 : index
    %c0_5 = arith.constant 0 : index
    %2 = vector.load %arg3[%c0_3, %c0_4, %c0_5] : memref<1x16x128xf32, #tpu.memory_space<vmem>>, vector<1x16x128xf32>
    %3 = vector.shape_cast %2 : vector<1x16x128xf32> to vector<16x128xf32>
    %cst = arith.constant dense<0.000000e+00> : vector<16x128xf32>
    %4 = tpu.matmul %0, %3, %cst {dimension_numbers = #tpu.dot_dimension_numbers<[1], [0], [0], [1], [0, 0, 1, 1], [], []>} : vector<16x16xf32>, vector<16x128xf32>, vector<16x128xf32> -> vector<16x128xf32>
    %cst_6 = arith.constant dense<0.000000e+00> : vector<16x128xf32>
    %5 = tpu.matmul %4, %1, %cst_6 {dimension_numbers = #tpu.dot_dimension_numbers<[1], [0], [0], [1], [0, 0, 1, 1], [], []>} : vector<16x128xf32>, vector<128x128xf32>, vector<16x128xf32> -> vector<16x128xf32>
    %c0_7 = arith.constant 0 : index
    %c0_8 = arith.constant 0 : index
    %c0_9 = arith.constant 0 : index
    %6 = vector.load %arg4[%c0_7, %c0_8, %c0_9] : memref<1x16x128xf32, #tpu.memory_space<vmem>>, vector<1x16x128xf32>
    %7 = vector.shape_cast %6 : vector<1x16x128xf32> to vector<16x128xf32>
    %8 = vector.shape_cast %5 : vector<16x128xf32> to vector<1x16x128xf32>
    tpu.vector_store %arg4[%c0_7, %c0_8, %c0_9], %8 {strides = array<i32>} : memref<1x16x128xf32, #tpu.memory_space<vmem>>, vector<1x16x128xf32>,
    return
  }
  func.func @transform_0(%arg0: i32) -> (i32, i32) {
    %c0_i32 = arith.constant 0 : i32
    %c0_i32_0 = arith.constant 0 : i32
    %c0_i32_1 = arith.constant 0 : i32
    return %c0_i32, %c0_i32_0 : i32, i32
  }
  func.func @transform_1(%arg0: i32) -> (i32, i32) {
    %c0_i32 = arith.constant 0 : i32
    %c0_i32_0 = arith.constant 0 : i32
    %c0_i32_1 = arith.constant 0 : i32
    return %c0_i32, %c0_i32_0 : i32, i32
  }
  func.func @transform_2(%arg0: i32) -> (i32, i32, i32) {
    %c0_i32 = arith.constant 0 : i32
    %c0_i32_0 = arith.constant 0 : i32
    %c0_i32_1 = arith.constant 0 : i32
    return %arg0, %c0_i32, %c0_i32_0 : i32, i32, i32
  }
  func.func @transform_3(%arg0: i32) -> (i32, i32, i32) {
    %c0_i32 = arith.constant 0 : i32
    %c0_i32_0 = arith.constant 0 : i32
    %c0_i32_1 = arith.constant 0 : i32
    return %arg0, %c0_i32, %c0_i32_0 : i32, i32, i32
  }
}

</mosaic_0001>

<llo_original>
// kernel: tpu_custom_call.1
$region0: #{tpu_custom_call.1}
  #allocation0 [shape = 'u32[]', space=smem, size = 0x4, offset = 0x4, fixed_abs, tag = 'smem constant byte address 0x4 - core index']
  #allocation1 [shape = 'u32[144,128]{1,0:T(1,128)}', space=vmem, size = 0x12000, scoped, tag = 'internal scratch']
  %s0 = inlined_call_operand.hbm [shape: f32[16,16], index: 0, kind: input, shape index: {}]
  %s1 = inlined_call_operand.hbm [shape: f32[128,128], index: 1, kind: input, shape index: {}]
  %s2 = inlined_call_operand.hbm [shape: f32[1,16,128], index: 2, kind: input, shape index: {}]
  %s3 = inlined_call_operand.hbm [shape: f32[1,16,128], index: 3, kind: output, shape index: {}]
  %s4 = sld [smem:[#allocation0]]
  $region34: #{tpu_custom_call.1} parent=0
    _
  %s6 = ssub.s32 1, %s4
  %s7 = scalar_select 0, %s6, %s4
  $region1: #{tpu_custom_call.1} parent=0
    #allocation2 [shape = 'u8[8192]{0}', space=vmem, size = 0x2000, scoped, tag = 'input window, operand 0, single buffered']
    #allocation3 [shape = 's32[1]{0}', space=sflag, size = 0x4, scoped, tag = 'scoped memory for tpu_custom_call.1']
    #allocation4 [shape = 's32[1]{0}', space=sflag, size = 0x4, scoped, tag = 'scoped memory for tpu_custom_call.1']
    #allocation5 [shape = 'u8[65536]{0}', space=vmem, size = 0x10000, scoped, tag = 'input window, operand 1, single buffered']
    #allocation6 [shape = 's32[1]{0}', space=sflag, size = 0x4, scoped, tag = 'scoped memory for tpu_custom_call.1']
    #allocation7 [shape = 'u8[8192]{0}', space=vmem, size = 0x2000, scoped, tag = 'input window, operand 2, single buffered']
    #allocation8 [shape = 'u8[8192]{0}', space=vmem, size = 0x2000, scoped, tag = 'output window, operand 0, single buffered']
    %8 = vsyncpa [#allocation3], 0
    %9 = vsyncpa [#allocation6], 0
    %10 = vsyncpa [#allocation4], 0
    // Predicated region
    $region2: #{tpu_custom_call.1} parent=1 // pred_check
      _
    $region3: #{tpu_custom_call.1} parent=1 // pred_check_branch
      %12 = sbr.rel (0) target = $region5
    $region4: #{tpu_custom_call.1} parent=1 // pred_region
      %s14 = ssub.s32 256, 256
      %15 = vsyncadd [#allocation3], %s14
      %s16 = sshll.u32 [#allocation2], 4
      %s17 = int_to_ptr.vmem [resolvable:$true] %s16
      %22 = dma.hbm_to_vmem [thread:$0]  %s0, 256, %s17, [#allocation3], 128, 128, 8
    $region5: #{tpu_custom_call.1} parent=1 // pred_fallthru
      _
    // Predicated region
    $region6: #{tpu_custom_call.1} parent=1 // pred_check
      _
    $region7: #{tpu_custom_call.1} parent=1 // pred_check_branch
      %24 = sbr.rel (0) target = $region9
    $region8: #{tpu_custom_call.1} parent=1 // pred_region
      %s26 = ssub.s32 2048, 2048
      %27 = vsyncadd [#allocation6], %s26
      %s28 = sshll.u32 [#allocation5], 4
      %s29 = int_to_ptr.vmem [resolvable:$true] %s28
      %34 = dma.hbm_to_vmem [thread:$0]  %s1, 2048, %s29, [#allocation6], 128, 128, 8
    $region9: #{tpu_custom_call.1} parent=1 // pred_fallthru
      _
    // Predicated region
    $region10: #{tpu_custom_call.1} parent=1 // pred_check
      _
    $region11: #{tpu_custom_call.1} parent=1 // pred_check_branch
      %36 = sbr.rel (0) target = $region13
    $region12: #{tpu_custom_call.1} parent=1 // pred_region
      %s38 = ssub.s32 256, 256
      %39 = vsyncadd [#allocation6], %s38
      %s40 = sshll.u32 [#allocation7], 4
      %s41 = int_to_ptr.vmem [resolvable:$true] %s40
      %46 = dma.hbm_to_vmem [thread:$0]  %s2, 256, %s41, [#allocation6], 128, 128, 8
    $region13: #{tpu_custom_call.1} parent=1 // pred_fallthru
      _
    // Predicated region
    $region14: #{tpu_custom_call.1} parent=1 // pred_check
      _
    $region15: #{tpu_custom_call.1} parent=1 // pred_check_branch
      %48 = sbr.rel (0) target = $region17
    $region16: #{tpu_custom_call.1} parent=1 // pred_region
      %49 = dma.done [#allocation3], 256
    $region17: #{tpu_custom_call.1} parent=1 // pred_fallthru
      _
    // Predicated region
    $region18: #{tpu_custom_call.1} parent=1 // pred_check
      _
    $region19: #{tpu_custom_call.1} parent=1 // pred_check_branch
      %51 = sbr.rel (0) target = $region21
    $region20: #{tpu_custom_call.1} parent=1 // pred_region
      %52 = dma.done [#allocation6], 2048
    $region21: #{tpu_custom_call.1} parent=1 // pred_fallthru
      _
    // Predicated region
    $region22: #{tpu_custom_call.1} parent=1 // pred_check
      _
    $region23: #{tpu_custom_call.1} parent=1 // pred_check_branch
      %54 = sbr.rel (0) target = $region25
    $region24: #{tpu_custom_call.1} parent=1 // pred_region
      %55 = dma.done [#allocation6], 256
    $region25: #{tpu_custom_call.1} parent=1 // pred_fallthru
      _
    %v56 = vld [vmem:[#allocation2] sm:$0xff]
    %v57 = vld [vmem:[#allocation2 + $0x8] sm:$0xff]
    %v58 = vld [vmem:[#allocation5] sm:$0xff]
    %v59 = vld [vmem:[#allocation5 + $0x8] sm:$0xff]
    %v60 = vld [vmem:[#allocation5 + $0x10] sm:$0xff]
    %v61 = vld [vmem:[#allocation5 + $0x18] sm:$0xff]
    %v62 = vld [vmem:[#allocation5 + $0x20] sm:$0xff]
    %v63 = vld [vmem:[#allocation5 + $0x28] sm:$0xff]
    %v64 = vld [vmem:[#allocation5 + $0x30] sm:$0xff]
    %v65 = vld [vmem:[#allocation5 + $0x38] sm:$0xff]
    %v66 = vld [vmem:[#allocation5 + $0x40] sm:$0xff]
    %v67 = vld [vmem:[#allocation5 + $0x48] sm:$0xff]
    %v68 = vld [vmem:[#allocation5 + $0x50] sm:$0xff]
    %v69 = vld [vmem:[#allocation5 + $0x58] sm:$0xff]
    %v70 = vld [vmem:[#allocation5 + $0x60] sm:$0xff]
    %v71 = vld [vmem:[#allocation5 + $0x68] sm:$0xff]
    %v72 = vld [vmem:[#allocation5 + $0x70] sm:$0xff]
    %v73 = vld [vmem:[#allocation5 + $0x78] sm:$0xff]
    %v74 = vld [vmem:[#allocation7] sm:$0xff]
    %v75 = vld [vmem:[#allocation7 + $0x8] sm:$0xff]
    %vm76 = vcmask 130048
    %v78 = vsel %vm76, %v56, 0
    %v81 = vsel %vm76, %v57, 0
    %83 = vmatprep.subr.mxu0 0.0
    %84 = vmatpush1.msra.mxu0 %v74
    %85 = vmatprep.subr.mxu0 0.0
    %86 = vmatpush1.msra.mxu0 %v75
    %87 = vmatprep.subr.mxu0 0.0
    %88 = vmatpush1.msra.mxu0 0.0
    %89 = vmatprep.subr.mxu0 0.0
    %90 = vmatpush1.msra.mxu0 0.0
    %91 = vmatprep.subr.mxu0 0.0
    %92 = vmatpush1.msra.mxu0 0.0
    %93 = vmatprep.subr.mxu0 0.0
    %94 = vmatpush1.msra.mxu0 0.0
    %95 = vmatprep.subr.mxu0 0.0
    %96 = vmatpush1.msra.mxu0 0.0
    %97 = vmatprep.subr.mxu0 0.0
    %98 = vmatpush1.msra.mxu0 0.0
    %99 = vmatprep.subr.mxu0 0.0
    %100 = vmatpush1.msra.mxu0 0.0
    %101 = vmatprep.subr.mxu0 0.0
    %102 = vmatpush1.msra.mxu0 0.0
    %103 = vmatprep.subr.mxu0 0.0
    %104 = vmatpush1.msra.mxu0 0.0
    %105 = vmatprep.subr.mxu0 0.0
    %106 = vmatpush1.msra.mxu0 0.0
    %107 = vmatprep.subr.mxu0 0.0
    %108 = vmatpush1.msra.mxu0 0.0
    %109 = vmatprep.subr.mxu0 0.0
    %110 = vmatpush1.msra.mxu0 0.0
    %111 = vmatprep.subr.mxu0 0.0
    %112 = vmatpush1.msra.mxu0 0.0
    %113 = vmatprep.subr.mxu0 0.0
    %114 = vmatpush1.msra.mxu0 0.0
    %115 = vmatprep.subr.mxu0 0.0
    %116 = vmatpush1.msra.mxu0 0.0
    %117 = vmatprep.subr.mxu0 0.0
    %118 = vmatpush1.msra.mxu0 0.0
    %119 = vmatprep.subr.mxu0 0.0
    %120 = vmatpush1.msra.mxu0 0.0
    %121 = vmatprep.subr.mxu0 0.0
    %122 = vmatpush1.msra.mxu0 0.0
    %123 = vmatprep.subr.mxu0 0.0
    %124 = vmatpush1.msra.mxu0 0.0
    %125 = vmatprep.subr.mxu0 0.0
    %126 = vmatpush1.msra.mxu0 0.0
    %127 = vmatprep.subr.mxu0 0.0
    %128 = vmatpush1.msra.mxu0 0.0
    %129 = vmatprep.subr.mxu0 0.0
    %130 = vmatpush1.msra.mxu0 0.0
    %131 = vmatprep.subr.mxu0 0.0
    %132 = vmatpush1.msra.mxu0 0.0
    %133 = vmatprep.subr.mxu0 0.0
    %134 = vmatpush1.msra.mxu0 0.0
    %135 = vmatprep.subr.mxu0 0.0
    %136 = vmatpush1.msra.mxu0 0.0
    %137 = vmatprep.subr.mxu0 0.0
    %138 = vmatpush1.msra.mxu0 0.0
    %139 = vmatprep.subr.mxu0 0.0
    %140 = vmatpush1.msra.mxu0 0.0
    %141 = vmatprep.subr.mxu0 0.0
    %142 = vmatpush1.msra.mxu0 0.0
    %143 = vmatprep.subr.mxu0 0.0
    %144 = vmatpush1.msra.mxu0 0.0
    %145 = vmatprep.subr.mxu0 0.0
    %146 = vmatpush1.msra.mxu0 0.0
    %147 = vmatprep.mubr.f32.mxu0 0.0
    %148 = vmatmul.mubr.f32.gmra.mrb[0].mxu0 %v78
    %v149 = vpop.f32.mrb[0].mxu0
    %v150 = vadd.f32 0.0, %v149
    %v151 = vpop.f32.mrb[0].mxu0
    %152 = vmatprep.mubr.f32.mxu0 0.0
    %153 = vmatmul.mubr.f32.gmra.mrb[0].mxu0 %v81
    %v154 = vpop.f32.mrb[0].mxu0
    %v155 = vadd.f32 0.0, %v154
    %v156 = vpop.f32.mrb[0].mxu0
    %157 = vdwg.mxu0
    %158 = vmatprep.subr.mxu0 0.0
    %159 = vmatpush1.msra.mxu0 %v58
    %160 = vmatprep.subr.mxu0 0.0
    %161 = vmatpush1.msra.mxu0 %v59
    %162 = vmatprep.subr.mxu0 0.0
    %163 = vmatpush1.msra.mxu0 %v60
    %164 = vmatprep.subr.mxu0 0.0
    %165 = vmatpush1.msra.mxu0 %v61
    %166 = vmatprep.subr.mxu0 0.0
    %167 = vmatpush1.msra.mxu0 %v62
    %168 = vmatprep.subr.mxu0 0.0
    %169 = vmatpush1.msra.mxu0 %v63
    %170 = vmatprep.subr.mxu0 0.0
    %171 = vmatpush1.msra.mxu0 %v64
    %172 = vmatprep.subr.mxu0 0.0
    %173 = vmatpush1.msra.mxu0 %v65
    %174 = vmatprep.subr.mxu0 0.0
    %175 = vmatpush1.msra.mxu0 %v66
    %176 = vmatprep.subr.mxu0 0.0
    %177 = vmatpush1.msra.mxu0 %v67
    %178 = vmatprep.subr.mxu0 0.0
    %179 = vmatpush1.msra.mxu0 %v68
    %180 = vmatprep.subr.mxu0 0.0
    %181 = vmatpush1.msra.mxu0 %v69
    %182 = vmatprep.subr.mxu0 0.0
    %183 = vmatpush1.msra.mxu0 %v70
    %184 = vmatprep.subr.mxu0 0.0
    %185 = vmatpush1.msra.mxu0 %v71
    %186 = vmatprep.subr.mxu0 0.0
    %187 = vmatpush1.msra.mxu0 %v72
    %188 = vmatprep.subr.mxu0 0.0
    %189 = vmatpush1.msra.mxu0 %v73
    %190 = vmatprep.subr.mxu0 0.0
    %191 = vmatpush1.msra.mxu0 0.0
    %192 = vmatprep.subr.mxu0 0.0
    %193 = vmatpush1.msra.mxu0 0.0
    %194 = vmatprep.subr.mxu0 0.0
    %195 = vmatpush1.msra.mxu0 0.0
    %196 = vmatprep.subr.mxu0 0.0
    %197 = vmatpush1.msra.mxu0 0.0
    %198 = vmatprep.subr.mxu0 0.0
    %199 = vmatpush1.msra.mxu0 0.0
    %200 = vmatprep.subr.mxu0 0.0
    %201 = vmatpush1.msra.mxu0 0.0
    %202 = vmatprep.subr.mxu0 0.0
    %203 = vmatpush1.msra.mxu0 0.0
    %204 = vmatprep.subr.mxu0 0.0
    %205 = vmatpush1.msra.mxu0 0.0
    %206 = vmatprep.subr.mxu0 0.0
    %207 = vmatpush1.msra.mxu0 0.0
    %208 = vmatprep.subr.mxu0 0.0
    %209 = vmatpush1.msra.mxu0 0.0
    %210 = vmatprep.subr.mxu0 0.0
    %211 = vmatpush1.msra.mxu0 0.0
    %212 = vmatprep.subr.mxu0 0.0
    %213 = vmatpush1.msra.mxu0 0.0
    %214 = vmatprep.subr.mxu0 0.0
    %215 = vmatpush1.msra.mxu0 0.0
    %216 = vmatprep.subr.mxu0 0.0
    %217 = vmatpush1.msra.mxu0 0.0
    %218 = vmatprep.subr.mxu0 0.0
    %219 = vmatpush1.msra.mxu0 0.0
    %220 = vmatprep.subr.mxu0 0.0
    %221 = vmatpush1.msra.mxu0 0.0
    %222 = vmatprep.mubr.f32.mxu0 0.0
    %223 = vmatmul.mubr.f32.gmra.mrb[0].mxu0 %v150
    %v224 = vpop.f32.mrb[0].mxu0
    %v225 = vadd.f32 0.0, %v224
    %v226 = vpop.f32.mrb[0].mxu0
    %227 = vmatprep.mubr.f32.mxu0 0.0
    %228 = vmatmul.mubr.f32.gmra.mrb[0].mxu0 %v155
    %v229 = vpop.f32.mrb[0].mxu0
    %v230 = vadd.f32 0.0, %v229
    %v231 = vpop.f32.mrb[0].mxu0
    %232 = vdwg.mxu0
    %233 = vst [vmem:[#allocation8] sm:$0xff] %v225
    %234 = vst [vmem:[#allocation8 + $0x8] sm:$0xff] %v230
    // Predicated region
    $region26: #{tpu_custom_call.1} parent=1 // pred_check
      _
    $region27: #{tpu_custom_call.1} parent=1 // pred_check_branch
      %236 = sbr.rel (0) target = $region29
    $region28: #{tpu_custom_call.1} parent=1 // pred_region
      %s238 = ssub.s32 256, 256
      %239 = vsyncadd [#allocation4], %s238
      %s240 = sshll.u32 [#allocation8], 4
      %s241 = int_to_ptr.vmem [resolvable:$true] %s240
      %246 = dma.vmem_to_hbm [thread:$0]  %s241, 256, %s3, [#allocation4], 128, 128, 8
    $region29: #{tpu_custom_call.1} parent=1 // pred_fallthru
      _
    // Predicated region
    $region30: #{tpu_custom_call.1} parent=1 // pred_check
      _
    $region31: #{tpu_custom_call.1} parent=1 // pred_check_branch
      %248 = sbr.rel (0) target = $region33
    $region32: #{tpu_custom_call.1} parent=1 // pred_region
      %249 = dma.done [#allocation4], 256
    $region33: #{tpu_custom_call.1} parent=1 // pred_fallthru
      _
    %250 = vsyncpa [#allocation3], 1
    %251 = vsyncpa [#allocation6], 1
    %252 = vsyncpa [#allocation4], 1

</llo_original>
